<compile_context>
chip_gen: v7x
topology: tpu7x:2x2x1
jax: 0.10.0
libtpu: 0.0.40
codegen_flags: <defaults>
</compile_context>

<pallas_src>
import functools

import jax
import jax.numpy as jnp
from jax.experimental import pallas as pl
from jax.experimental.pallas import tpu as pltpu


# ---------------------------------------------------------------------------
# Pass 1: Q / K / V projections (computed once, emitted head-major).
# ---------------------------------------------------------------------------
def _proj_kernel(y_ref, x_ref, wq_ref, wkv_ref, q_ref, k_ref, v_ref, *, heads, emb):
    """One sequence tile: lane-dense projections, split once into (H, tile, e)."""
    h_all, e = heads, emb
    # All heads at once; K and V fused into one matmul (e**-0.5 folded into wq).
    q_flat = jnp.dot(y_ref[...], wq_ref[...],
                     preferred_element_type=jnp.float32)            # (bt, H*e)
    kv_flat = jnp.dot(x_ref[...], wkv_ref[...],
                      preferred_element_type=jnp.float32)           # (bt, 2*H*e)
    # One-time split into head-major layout so the attention hot loop never does
    # sub-128 lane slicing.
    for h in range(h_all):
        q_ref[h] = q_flat[:, h * e:(h + 1) * e].astype(q_ref.dtype)
        k_ref[h] = kv_flat[:, h * e:(h + 1) * e].astype(k_ref.dtype)
        v_ref[h] = kv_flat[:, (h_all + h) * e:(h_all + h + 1) * e].astype(v_ref.dtype)


# ---------------------------------------------------------------------------
# Pass 2: flash-style attention + unify (online softmax over the kv axis).
# ---------------------------------------------------------------------------
def _flash_kernel(q_ref, k_ref, v_ref, wu_ref, bu_ref, o_ref,
                  m_sc, l_sc, acc_sc, *, heads):
    """One (query tile, kv tile) step for all heads at once."""
    kv = pl.program_id(1)

    @pl.when(kv == 0)
    def _():
        m_sc[...] = jnp.full(m_sc.shape, -jnp.inf, m_sc.dtype)
        l_sc[...] = jnp.zeros(l_sc.shape, l_sc.dtype)
        acc_sc[...] = jnp.zeros(acc_sc.shape, acc_sc.dtype)

    q = q_ref[...]                                      # (H, bq, e) bf16
    k = k_ref[...]                                      # (H, bk, e) bf16
    v = v_ref[...]                                      # (H, bk, e) bf16

    # Batched over heads; contraction over e (no explicit transpose of K).
    s = jnp.einsum('hqe,hke->hqk', q, k,
                   preferred_element_type=jnp.float32)  # (H, bq, bk) f32

    m_prev = m_sc[...]
    m_new = jnp.maximum(m_prev, jnp.max(s, axis=-1, keepdims=True))
    alpha = jnp.exp(m_prev - m_new)                     # (H, bq, 1)
    p = jnp.exp(s - m_new)                              # (H, bq, bk) f32 (unnormalized)
    l_sc[...] = alpha * l_sc[...] + jnp.sum(p, axis=-1, keepdims=True)
    acc_sc[...] = alpha * acc_sc[...] + jnp.einsum(
        'hqk,hke->hqe', p.astype(v.dtype), v,
        preferred_element_type=jnp.float32)             # (H, bq, e) f32
    m_sc[...] = m_new

    @pl.when(kv == pl.num_programs(1) - 1)
    def _():
        # Deferred normalization: scale the accumulator, not the probability slab.
        inv_l = pl.reciprocal(l_sc[...], approx=True)   # (H, bq, 1)
        out = jnp.zeros(o_ref.shape, jnp.float32)       # (bq, e)
        for h in range(heads):
            oh = (acc_sc[h] * inv_l[h]).astype(jnp.bfloat16)        # (bq, e)
            # Per-head unify accumulation; wu_ref[h] is a cheap leading-axis slice
            # of the head-major (H, e, e) unify weights.
            out = out + jnp.dot(oh, wu_ref[h], preferred_element_type=jnp.float32)
        o_ref[...] = (out + bu_ref[...]).astype(o_ref.dtype)


# ---------------------------------------------------------------------------
# Host wrapper.
# ---------------------------------------------------------------------------
def _pick_block(t, target=256):
    """Largest nice tile that divides t (256 fills the 256-wide MXUs on v6e/v7x)."""
    if t <= target:
        return t
    for b in (target, 256, 128, 64, 32, 16, 8):
        if b <= target and t % b == 0:
            return b
    return t


def _clamp_vmem(estimate_bytes):
    # Size-derived limit (2x headroom), capped at 48 MiB so the same tiling fits
    # within v7x's 64 MiB per-TensorCore VMEM (v5e/v6e have 128 MiB).
    return int(min(48 * 1024 * 1024, max(32 * 1024 * 1024, 2 * estimate_bytes)))


def attention_wide(x, y, wq_all, wkv_all, wu_heads, bu, *, heads,
                   block_q=None, block_k=None, block_t=None):
    """Pallas forward of AttentionWide (eval-mode dropout == identity).

    Args:
      x, y:      (t, e) activations (keys/values source, queries source).
      wq_all:    (e, heads*e)   = toqueries.weight.T with the e**-0.5 scaling folded in.
      wkv_all:   (e, 2*heads*e) = concat([tokeys.weight.T, tovalues.weight.T], axis=1).
      wu_heads:  (heads, e, e)  = unifyheads.weight.T reshaped head-major.
      bu:        (1, e)         = unifyheads.bias.
    Returns:
      (t, e) float32.
    """
    t, e = x.shape
    assert y.shape == (t, e)

    block_q = _pick_block(t) if block_q is None else block_q
    block_k = _pick_block(t) if block_k is None else block_k
    block_t = _pick_block(t) if block_t is None else block_t
    assert t % block_q == 0 and t % block_k == 0 and t % block_t == 0

    x_bf = x.astype(jnp.bfloat16)
    y_bf = y.astype(jnp.bfloat16)
    wq_bf = wq_all.astype(jnp.bfloat16)
    wkv_bf = wkv_all.astype(jnp.bfloat16)
    wu_bf = wu_heads.astype(jnp.bfloat16)
    bu_f32 = bu.astype(jnp.float32)

    # -------- Pass 1: projections (run exactly once; head-major bf16 outputs). -------
    n_t = t // block_t
    proj_kernel = functools.partial(_proj_kernel, heads=heads, emb=e)
    proj_flops = 2 * t * e * (3 * heads * e)
    proj_bytes = 2 * (2 * t * e) + 2 * (3 * heads * e * e) + 2 * (3 * heads * t * e)
    proj_vmem = 2 * (2 * (block_t * e * 2) + 3 * heads * e * e * 2
                     + 3 * heads * block_t * e * 2)
    q_hme, k_hme, v_hme = pl.pallas_call(
        proj_kernel,
        out_shape=(jax.ShapeDtypeStruct((heads, t, e), jnp.bfloat16),) * 3,
        grid_spec=pltpu.PrefetchScalarGridSpec(
            num_scalar_prefetch=0,
            grid=(n_t,),
            in_specs=[
                pl.BlockSpec((block_t, e), lambda i: (i, 0)),            # y (queries src)
                pl.BlockSpec((block_t, e), lambda i: (i, 0)),            # x (keys/values src)
                pl.BlockSpec((e, heads * e), lambda i: (0, 0)),          # wq_all (scaled)
                pl.BlockSpec((e, 2 * heads * e), lambda i: (0, 0)),      # wkv_all
            ],
            out_specs=[
                pl.BlockSpec((heads, block_t, e), lambda i: (0, i, 0)),  # Q (H, t, e)
                pl.BlockSpec((heads, block_t, e), lambda i: (0, i, 0)),  # K (H, t, e)
                pl.BlockSpec((heads, block_t, e), lambda i: (0, i, 0)),  # V (H, t, e)
            ],
        ),
        compiler_params=pltpu.CompilerParams(
            dimension_semantics=("parallel",),
            vmem_limit_bytes=_clamp_vmem(proj_vmem),
        ),
        cost_estimate=pl.CostEstimate(flops=proj_flops, transcendentals=0,
                                      bytes_accessed=proj_bytes),
    )(y_bf, x_bf, wq_bf, wkv_bf)

    # -------- Pass 2: flash attention + unify. --------
    n_q = t // block_q
    n_kv = t // block_k
    flash_kernel = functools.partial(_flash_kernel, heads=heads)
    attn_flops = 4 * heads * t * t * e + 2 * t * heads * e * e
    attn_bytes = 2 * 3 * heads * t * e + 2 * heads * e * e + 4 * e + 4 * t * e
    attn_vmem = (2 * (heads * block_q * e * 2              # q (double buffered)
                      + 2 * heads * block_k * e * 2        # k, v
                      + heads * e * e * 2                  # wu
                      + e * 4                              # bias
                      + block_q * e * 4)                   # output
                 + heads * block_q * (2 + e) * 4)          # scratch m, l, acc

    return pl.pallas_call(
        flash_kernel,
        out_shape=jax.ShapeDtypeStruct((t, e), jnp.float32),
        grid_spec=pltpu.PrefetchScalarGridSpec(
            num_scalar_prefetch=0,
            grid=(n_q, n_kv),
            in_specs=[
                pl.BlockSpec((heads, block_q, e), lambda i, j: (0, i, 0)),  # Q tile
                pl.BlockSpec((heads, block_k, e), lambda i, j: (0, j, 0)),  # K tile
                pl.BlockSpec((heads, block_k, e), lambda i, j: (0, j, 0)),  # V tile
                pl.BlockSpec((heads, e, e), lambda i, j: (0, 0, 0)),        # wu (head-major)
                pl.BlockSpec((1, e), lambda i, j: (0, 0)),                  # bias
            ],
            out_specs=pl.BlockSpec((block_q, e), lambda i, j: (i, 0)),
            scratch_shapes=[
                pltpu.VMEM((heads, block_q, 1), jnp.float32),   # running max m
                pltpu.VMEM((heads, block_q, 1), jnp.float32),   # running sum l
                pltpu.VMEM((heads, block_q, e), jnp.float32),   # running PV acc
            ],
        ),
        compiler_params=pltpu.CompilerParams(
            dimension_semantics=("parallel", "arbitrary"),   # kv reduction axis last
            vmem_limit_bytes=_clamp_vmem(attn_vmem),
        ),
        cost_estimate=pl.CostEstimate(flops=attn_flops,
                                      transcendentals=heads * t * t,
                                      bytes_accessed=attn_bytes),
    )(q_hme, k_hme, v_hme, wu_bf, bu_f32)


def reference_attention_wide(x, y, wk_t, wq_t, wv_t, wu_t, b, heads):
    """Pure-JAX f32 reference mirroring the PyTorch forward (eval-mode dropout)."""
    t, e = x.shape
    k = (x @ wk_t).reshape(t, heads, e).transpose(1, 0, 2)   # (h, t, e)
    q = (y @ wq_t).reshape(t, heads, e).transpose(1, 0, 2)
    v = (x @ wv_t).reshape(t, heads, e).transpose(1, 0, 2)
    q = q / e ** 0.25
    k = k / e ** 0.25
    dot = jax.nn.softmax(jnp.einsum("hqe,hke->hqk", q, k), axis=-1)
    out = jnp.einsum("hqk,hke->hqe", dot, v)                 # (h, t, e)
    out = out.transpose(1, 0, 2).reshape(t, heads * e)
    return out @ wu_t + b


if __name__ == "__main__":
    # Small deterministic problem: emb=32, heads=8, seq t=32; block 16 so both the
    # parallel query axis and the online-softmax kv axis take multiple steps.
    emb, heads, t = 32, 8, 32

    key = jax.random.PRNGKey(0)
    kx, ky, kk, kq, kv, ku, kb = jax.random.split(key, 7)

    x = jax.random.normal(kx, (t, emb), dtype=jnp.float32)
    y = jax.random.normal(ky, (t, emb), dtype=jnp.float32)

    # PyTorch parameter layouts:
    #   tokeys/toqueries/tovalues: nn.Linear(emb, emb*heads, bias=False).weight -> (emb*heads, emb)
    #   unifyheads:                nn.Linear(heads*emb, emb).weight -> (emb, heads*emb), bias (emb,)
    w_keys = jax.random.normal(kk, (emb * heads, emb), dtype=jnp.float32) * 0.05
    w_queries = jax.random.normal(kq, (emb * heads, emb), dtype=jnp.float32) * 0.05
    w_values = jax.random.normal(kv, (emb * heads, emb), dtype=jnp.float32) * 0.05
    w_unify = jax.random.normal(ku, (emb, heads * emb), dtype=jnp.float32) * 0.05
    b_unify = jax.random.normal(kb, (emb,), dtype=jnp.float32) * 0.05

    # One-time host-side weight prep:
    #  * transpose to "inp @ W.T" layout,
    #  * fold the combined e**-0.5 query/key scaling into the query weights,
    #  * fuse K and V projection weights along their output dim,
    #  * reshape the unify weights head-major (H, e, e).
    scale = float(emb) ** -0.5
    wq_all = w_queries.T * scale                                   # (e, H*e)
    wkv_all = jnp.concatenate([w_keys.T, w_values.T], axis=1)      # (e, 2*H*e)
    wu_heads = w_unify.T.reshape(heads, emb, emb)                  # (H, e, e)
    bu = b_unify.reshape(1, emb)

    out = attention_wide(x, y, wq_all, wkv_all, wu_heads, bu, heads=heads,
                         block_q=16, block_k=16, block_t=16)
    out = jax.block_until_ready(out)

    ref = reference_attention_wide(x, y, w_keys.T, w_queries.T, w_values.T,
                                   w_unify.T, b_unify, heads)
    assert out.shape == (t, emb)
    # bf16 MXU operands with f32 accumulation -> loose-but-meaningful tolerance.
    assert jnp.allclose(out, ref, atol=2e-2, rtol=2e-2), "mismatch vs reference"

    print("KERNEL_OK")
</pallas_src>

<mosaic_0001>
module attributes {stable_mosaic.version = 11 : i64} {
  func.func @_proj_kernel(%arg0: i32, %arg1: memref<16x32xbf16, #tpu.memory_space<vmem>>, %arg2: memref<16x32xbf16, #tpu.memory_space<vmem>>, %arg3: memref<32x256xbf16, #tpu.memory_space<vmem>>, %arg4: memref<32x512xbf16, #tpu.memory_space<vmem>>, %arg5: memref<8x16x32xbf16, #tpu.memory_space<vmem>>, %arg6: memref<8x16x32xbf16, #tpu.memory_space<vmem>>, %arg7: memref<8x16x32xbf16, #tpu.memory_space<vmem>>) attributes {dimension_semantics = [#tpu.dimension_semantics<parallel>], iteration_bounds = array<i64: 2>, scalar_prefetch = 0 : i64, scratch_operands = 0 : i64, tpu.core_type = #tpu.core_type<tc>, window_params = [{transform_indices = @transform_0, window_bounds = array<i64: 16, 32>}, {transform_indices = @transform_1, window_bounds = array<i64: 16, 32>}, {pipeline_mode = #tpu.pipeline_mode<synchronous>, transform_indices = @transform_2, window_bounds = array<i64: 32, 256>}, {pipeline_mode = #tpu.pipeline_mode<synchronous>, transform_indices = @transform_3, window_bounds = array<i64: 32, 512>}, {transform_indices = @transform_4, window_bounds = array<i64: 8, 16, 32>}, {transform_indices = @transform_5, window_bounds = array<i64: 8, 16, 32>}, {transform_indices = @transform_6, window_bounds = array<i64: 8, 16, 32>}]} {
    %c0 = arith.constant 0 : index
    %c0_0 = arith.constant 0 : index
    %0 = vector.load %arg1[%c0, %c0_0] : memref<16x32xbf16, #tpu.memory_space<vmem>>, vector<16x32xbf16>
    %c0_1 = arith.constant 0 : index
    %c0_2 = arith.constant 0 : index
    %1 = vector.load %arg3[%c0_1, %c0_2] : memref<32x256xbf16, #tpu.memory_space<vmem>>, vector<32x256xbf16>
    %cst = arith.constant dense<0.000000e+00> : vector<16x256xf32>
    %2 = tpu.matmul %0, %1, %cst {dimension_numbers = #tpu.dot_dimension_numbers<[1], [0], [0], [1], [0, 0, 1, 1], [], []>} : vector<16x32xbf16>, vector<32x256xbf16>, vector<16x256xf32> -> vector<16x256xf32>
    %c0_3 = arith.constant 0 : index
    %c0_4 = arith.constant 0 : index
    %3 = vector.load %arg2[%c0_3, %c0_4] : memref<16x32xbf16, #tpu.memory_space<vmem>>, vector<16x32xbf16>
    %c0_5 = arith.constant 0 : index
    %c0_6 = arith.constant 0 : index
    %4 = vector.load %arg4[%c0_5, %c0_6] : memref<32x512xbf16, #tpu.memory_space<vmem>>, vector<32x512xbf16>
    %cst_7 = arith.constant dense<0.000000e+00> : vector<16x512xf32>
    %5 = tpu.matmul %3, %4, %cst_7 {dimension_numbers = #tpu.dot_dimension_numbers<[1], [0], [0], [1], [0, 0, 1, 1], [], []>} : vector<16x32xbf16>, vector<32x512xbf16>, vector<16x512xf32> -> vector<16x512xf32>
    %6 = vector.extract_strided_slice %2 {offsets = [0, 0], sizes = [16, 32], strides = [1, 1]} : vector<16x256xf32> to vector<16x32xf32>
    %7 = arith.truncf %6 : vector<16x32xf32> to vector<16x32xbf16>
    %c0_8 = arith.constant 0 : index
    %c0_9 = arith.constant 0 : index
    %c0_10 = arith.constant 0 : index
    %8 = vector.load %arg5[%c0_8, %c0_9, %c0_10] : memref<8x16x32xbf16, #tpu.memory_space<vmem>>, vector<1x16x32xbf16>
    %9 = vector.shape_cast %8 : vector<1x16x32xbf16> to vector<16x32xbf16>
    %10 = vector.shape_cast %7 : vector<16x32xbf16> to vector<1x16x32xbf16>
    tpu.vector_store %arg5[%c0_8, %c0_9, %c0_10], %10 {strides = array<i32>} : memref<8x16x32xbf16, #tpu.memory_space<vmem>>, vector<1x16x32xbf16>,
    %11 = vector.extract_strided_slice %5 {offsets = [0, 0], sizes = [16, 32], strides = [1, 1]} : vector<16x512xf32> to vector<16x32xf32>
    %12 = arith.truncf %11 : vector<16x32xf32> to vector<16x32xbf16>
    %c0_11 = arith.constant 0 : index
    %c0_12 = arith.constant 0 : index
    %c0_13 = arith.constant 0 : index
    %13 = vector.load %arg6[%c0_11, %c0_12, %c0_13] : memref<8x16x32xbf16, #tpu.memory_space<vmem>>, vector<1x16x32xbf16>
    %14 = vector.shape_cast %13 : vector<1x16x32xbf16> to vector<16x32xbf16>
    %15 = vector.shape_cast %12 : vector<16x32xbf16> to vector<1x16x32xbf16>
    tpu.vector_store %arg6[%c0_11, %c0_12, %c0_13], %15 {strides = array<i32>} : memref<8x16x32xbf16, #tpu.memory_space<vmem>>, vector<1x16x32xbf16>,
    %16 = vector.extract_strided_slice %5 {offsets = [0, 256], sizes = [16, 32], strides = [1, 1]} : vector<16x512xf32> to vector<16x32xf32>
    %17 = arith.truncf %16 : vector<16x32xf32> to vector<16x32xbf16>
    %c0_14 = arith.constant 0 : index
    %c0_15 = arith.constant 0 : index
    %c0_16 = arith.constant 0 : index
    %18 = vector.load %arg7[%c0_14, %c0_15, %c0_16] : memref<8x16x32xbf16, #tpu.memory_space<vmem>>, vector<1x16x32xbf16>
    %19 = vector.shape_cast %18 : vector<1x16x32xbf16> to vector<16x32xbf16>
    %20 = vector.shape_cast %17 : vector<16x32xbf16> to vector<1x16x32xbf16>
    tpu.vector_store %arg7[%c0_14, %c0_15, %c0_16], %20 {strides = array<i32>} : memref<8x16x32xbf16, #tpu.memory_space<vmem>>, vector<1x16x32xbf16>,
    %21 = vector.extract_strided_slice %2 {offsets = [0, 32], sizes = [16, 32], strides = [1, 1]} : vector<16x256xf32> to vector<16x32xf32>
    %22 = arith.truncf %21 : vector<16x32xf32> to vector<16x32xbf16>
    %c1 = arith.constant 1 : index
    %c0_17 = arith.constant 0 : index
    %c0_18 = arith.constant 0 : index
    %23 = vector.load %arg5[%c1, %c0_17, %c0_18] : memref<8x16x32xbf16, #tpu.memory_space<vmem>>, vector<1x16x32xbf16>
    %24 = vector.shape_cast %23 : vector<1x16x32xbf16> to vector<16x32xbf16>
    %25 = vector.shape_cast %22 : vector<16x32xbf16> to vector<1x16x32xbf16>
    tpu.vector_store %arg5[%c1, %c0_17, %c0_18], %25 {strides = array<i32>} : memref<8x16x32xbf16, #tpu.memory_space<vmem>>, vector<1x16x32xbf16>,
    %26 = vector.extract_strided_slice %5 {offsets = [0, 32], sizes = [16, 32], strides = [1, 1]} : vector<16x512xf32> to vector<16x32xf32>
    %27 = arith.truncf %26 : vector<16x32xf32> to vector<16x32xbf16>
    %c1_19 = arith.constant 1 : index
    %c0_20 = arith.constant 0 : index
    %c0_21 = arith.constant 0 : index
    %28 = vector.load %arg6[%c1_19, %c0_20, %c0_21] : memref<8x16x32xbf16, #tpu.memory_space<vmem>>, vector<1x16x32xbf16>
    %29 = vector.shape_cast %28 : vector<1x16x32xbf16> to vector<16x32xbf16>
    %30 = vector.shape_cast %27 : vector<16x32xbf16> to vector<1x16x32xbf16>
    tpu.vector_store %arg6[%c1_19, %c0_20, %c0_21], %30 {strides = array<i32>} : memref<8x16x32xbf16, #tpu.memory_space<vmem>>, vector<1x16x32xbf16>,
    %31 = vector.extract_strided_slice %5 {offsets = [0, 288], sizes = [16, 32], strides = [1, 1]} : vector<16x512xf32> to vector<16x32xf32>
    %32 = arith.truncf %31 : vector<16x32xf32> to vector<16x32xbf16>
    %c1_22 = arith.constant 1 : index
    %c0_23 = arith.constant 0 : index
    %c0_24 = arith.constant 0 : index
    %33 = vector.load %arg7[%c1_22, %c0_23, %c0_24] : memref<8x16x32xbf16, #tpu.memory_space<vmem>>, vector<1x16x32xbf16>
    %34 = vector.shape_cast %33 : vector<1x16x32xbf16> to vector<16x32xbf16>
    %35 = vector.shape_cast %32 : vector<16x32xbf16> to vector<1x16x32xbf16>
    tpu.vector_store %arg7[%c1_22, %c0_23, %c0_24], %35 {strides = array<i32>} : memref<8x16x32xbf16, #tpu.memory_space<vmem>>, vector<1x16x32xbf16>,
    %36 = vector.extract_strided_slice %2 {offsets = [0, 64], sizes = [16, 32], strides = [1, 1]} : vector<16x256xf32> to vector<16x32xf32>
    %37 = arith.truncf %36 : vector<16x32xf32> to vector<16x32xbf16>
    %c2 = arith.constant 2 : index
    %c0_25 = arith.constant 0 : index
    %c0_26 = arith.constant 0 : index
    %38 = vector.load %arg5[%c2, %c0_25, %c0_26] : memref<8x16x32xbf16, #tpu.memory_space<vmem>>, vector<1x16x32xbf16>
    %39 = vector.shape_cast %38 : vector<1x16x32xbf16> to vector<16x32xbf16>
    %40 = vector.shape_cast %37 : vector<16x32xbf16> to vector<1x16x32xbf16>
    tpu.vector_store %arg5[%c2, %c0_25, %c0_26], %40 {strides = array<i32>} : memref<8x16x32xbf16, #tpu.memory_space<vmem>>, vector<1x16x32xbf16>,
    %41 = vector.extract_strided_slice %5 {offsets = [0, 64], sizes = [16, 32], strides = [1, 1]} : vector<16x512xf32> to vector<16x32xf32>
    %42 = arith.truncf %41 : vector<16x32xf32> to vector<16x32xbf16>
    %c2_27 = arith.constant 2 : index
    %c0_28 = arith.constant 0 : index
    %c0_29 = arith.constant 0 : index
    %43 = vector.load %arg6[%c2_27, %c0_28, %c0_29] : memref<8x16x32xbf16, #tpu.memory_space<vmem>>, vector<1x16x32xbf16>
    %44 = vector.shape_cast %43 : vector<1x16x32xbf16> to vector<16x32xbf16>
    %45 = vector.shape_cast %42 : vector<16x32xbf16> to vector<1x16x32xbf16>
    tpu.vector_store %arg6[%c2_27, %c0_28, %c0_29], %45 {strides = array<i32>} : memref<8x16x32xbf16, #tpu.memory_space<vmem>>, vector<1x16x32xbf16>,
    %46 = vector.extract_strided_slice %5 {offsets = [0, 320], sizes = [16, 32], strides = [1, 1]} : vector<16x512xf32> to vector<16x32xf32>
    %47 = arith.truncf %46 : vector<16x32xf32> to vector<16x32xbf16>
    %c2_30 = arith.constant 2 : index
    %c0_31 = arith.constant 0 : index
    %c0_32 = arith.constant 0 : index
    %48 = vector.load %arg7[%c2_30, %c0_31, %c0_32] : memref<8x16x32xbf16, #tpu.memory_space<vmem>>, vector<1x16x32xbf16>
    %49 = vector.shape_cast %48 : vector<1x16x32xbf16> to vector<16x32xbf16>
    %50 = vector.shape_cast %47 : vector<16x32xbf16> to vector<1x16x32xbf16>
    tpu.vector_store %arg7[%c2_30, %c0_31, %c0_32], %50 {strides = array<i32>} : memref<8x16x32xbf16, #tpu.memory_space<vmem>>, vector<1x16x32xbf16>,
    %51 = vector.extract_strided_slice %2 {offsets = [0, 96], sizes = [16, 32], strides = [1, 1]} : vector<16x256xf32> to vector<16x32xf32>
    %52 = arith.truncf %51 : vector<16x32xf32> to vector<16x32xbf16>
    %c3 = arith.constant 3 : index
    %c0_33 = arith.constant 0 : index
    %c0_34 = arith.constant 0 : index
    %53 = vector.load %arg5[%c3, %c0_33, %c0_34] : memref<8x16x32xbf16, #tpu.memory_space<vmem>>, vector<1x16x32xbf16>
    %54 = vector.shape_cast %53 : vector<1x16x32xbf16> to vector<16x32xbf16>
    %55 = vector.shape_cast %52 : vector<16x32xbf16> to vector<1x16x32xbf16>
    tpu.vector_store %arg5[%c3, %c0_33, %c0_34], %55 {strides = array<i32>} : memref<8x16x32xbf16, #tpu.memory_space<vmem>>, vector<1x16x32xbf16>,
    %56 = vector.extract_strided_slice %5 {offsets = [0, 96], sizes = [16, 32], strides = [1, 1]} : vector<16x512xf32> to vector<16x32xf32>
    %57 = arith.truncf %56 : vector<16x32xf32> to vector<16x32xbf16>
    %c3_35 = arith.constant 3 : index
    %c0_36 = arith.constant 0 : index
    %c0_37 = arith.constant 0 : index
    %58 = vector.load %arg6[%c3_35, %c0_36, %c0_37] : memref<8x16x32xbf16, #tpu.memory_space<vmem>>, vector<1x16x32xbf16>
    %59 = vector.shape_cast %58 : vector<1x16x32xbf16> to vector<16x32xbf16>
    %60 = vector.shape_cast %57 : vector<16x32xbf16> to vector<1x16x32xbf16>
    tpu.vector_store %arg6[%c3_35, %c0_36, %c0_37], %60 {strides = array<i32>} : memref<8x16x32xbf16, #tpu.memory_space<vmem>>, vector<1x16x32xbf16>,
    %61 = vector.extract_strided_slice %5 {offsets = [0, 352], sizes = [16, 32], strides = [1, 1]} : vector<16x512xf32> to vector<16x32xf32>
    %62 = arith.truncf %61 : vector<16x32xf32> to vector<16x32xbf16>
    %c3_38 = arith.constant 3 : index
    %c0_39 = arith.constant 0 : index
    %c0_40 = arith.constant 0 : index
    %63 = vector.load %arg7[%c3_38, %c0_39, %c0_40] : memref<8x16x32xbf16, #tpu.memory_space<vmem>>, vector<1x16x32xbf16>
    %64 = vector.shape_cast %63 : vector<1x16x32xbf16> to vector<16x32xbf16>
    %65 = vector.shape_cast %62 : vector<16x32xbf16> to vector<1x16x32xbf16>
    tpu.vector_store %arg7[%c3_38, %c0_39, %c0_40], %65 {strides = array<i32>} : memref<8x16x32xbf16, #tpu.memory_space<vmem>>, vector<1x16x32xbf16>,
    %66 = vector.extract_strided_slice %2 {offsets = [0, 128], sizes = [16, 32], strides = [1, 1]} : vector<16x256xf32> to vector<16x32xf32>
    %67 = arith.truncf %66 : vector<16x32xf32> to vector<16x32xbf16>
    %c4 = arith.constant 4 : index
    %c0_41 = arith.constant 0 : index
    %c0_42 = arith.constant 0 : index
    %68 = vector.load %arg5[%c4, %c0_41, %c0_42] : memref<8x16x32xbf16, #tpu.memory_space<vmem>>, vector<1x16x32xbf16>
    %69 = vector.shape_cast %68 : vector<1x16x32xbf16> to vector<16x32xbf16>
    %70 = vector.shape_cast %67 : vector<16x32xbf16> to vector<1x16x32xbf16>
    tpu.vector_store %arg5[%c4, %c0_41, %c0_42], %70 {strides = array<i32>} : memref<8x16x32xbf16, #tpu.memory_space<vmem>>, vector<1x16x32xbf16>,
    %71 = vector.extract_strided_slice %5 {offsets = [0, 128], sizes = [16, 32], strides = [1, 1]} : vector<16x512xf32> to vector<16x32xf32>
    %72 = arith.truncf %71 : vector<16x32xf32> to vector<16x32xbf16>
    %c4_43 = arith.constant 4 : index
    %c0_44 = arith.constant 0 : index
    %c0_45 = arith.constant 0 : index
    %73 = vector.load %arg6[%c4_43, %c0_44, %c0_45] : memref<8x16x32xbf16, #tpu.memory_space<vmem>>, vector<1x16x32xbf16>
    %74 = vector.shape_cast %73 : vector<1x16x32xbf16> to vector<16x32xbf16>
    %75 = vector.shape_cast %72 : vector<16x32xbf16> to vector<1x16x32xbf16>
    tpu.vector_store %arg6[%c4_43, %c0_44, %c0_45], %75 {strides = array<i32>} : memref<8x16x32xbf16, #tpu.memory_space<vmem>>, vector<1x16x32xbf16>,
    %76 = vector.extract_strided_slice %5 {offsets = [0, 384], sizes = [16, 32], strides = [1, 1]} : vector<16x512xf32> to vector<16x32xf32>
    %77 = arith.truncf %76 : vector<16x32xf32> to vector<16x32xbf16>
    %c4_46 = arith.constant 4 : index
    %c0_47 = arith.constant 0 : index
    %c0_48 = arith.constant 0 : index
    %78 = vector.load %arg7[%c4_46, %c0_47, %c0_48] : memref<8x16x32xbf16, #tpu.memory_space<vmem>>, vector<1x16x32xbf16>
    %79 = vector.shape_cast %78 : vector<1x16x32xbf16> to vector<16x32xbf16>
    %80 = vector.shape_cast %77 : vector<16x32xbf16> to vector<1x16x32xbf16>
    tpu.vector_store %arg7[%c4_46, %c0_47, %c0_48], %80 {strides = array<i32>} : memref<8x16x32xbf16, #tpu.memory_space<vmem>>, vector<1x16x32xbf16>,
    %81 = vector.extract_strided_slice %2 {offsets = [0, 160], sizes = [16, 32], strides = [1, 1]} : vector<16x256xf32> to vector<16x32xf32>
    %82 = arith.truncf %81 : vector<16x32xf32> to vector<16x32xbf16>
    %c5 = arith.constant 5 : index
    %c0_49 = arith.constant 0 : index
    %c0_50 = arith.constant 0 : index
    %83 = vector.load %arg5[%c5, %c0_49, %c0_50] : memref<8x16x32xbf16, #tpu.memory_space<vmem>>, vector<1x16x32xbf16>
    %84 = vector.shape_cast %83 : vector<1x16x32xbf16> to vector<16x32xbf16>
    %85 = vector.shape_cast %82 : vector<16x32xbf16> to vector<1x16x32xbf16>
    tpu.vector_store %arg5[%c5, %c0_49, %c0_50], %85 {strides = array<i32>} : memref<8x16x32xbf16, #tpu.memory_space<vmem>>, vector<1x16x32xbf16>,
    %86 = vector.extract_strided_slice %5 {offsets = [0, 160], sizes = [16, 32], strides = [1, 1]} : vector<16x512xf32> to vector<16x32xf32>
    %87 = arith.truncf %86 : vector<16x32xf32> to vector<16x32xbf16>
    %c5_51 = arith.constant 5 : index
    %c0_52 = arith.constant 0 : index
    %c0_53 = arith.constant 0 : index
    %88 = vector.load %arg6[%c5_51, %c0_52, %c0_53] : memref<8x16x32xbf16, #tpu.memory_space<vmem>>, vector<1x16x32xbf16>
    %89 = vector.shape_cast %88 : vector<1x16x32xbf16> to vector<16x32xbf16>
    %90 = vector.shape_cast %87 : vector<16x32xbf16> to vector<1x16x32xbf16>
    tpu.vector_store %arg6[%c5_51, %c0_52, %c0_53], %90 {strides = array<i32>} : memref<8x16x32xbf16, #tpu.memory_space<vmem>>, vector<1x16x32xbf16>,
    %91 = vector.extract_strided_slice %5 {offsets = [0, 416], sizes = [16, 32], strides = [1, 1]} : vector<16x512xf32> to vector<16x32xf32>
    %92 = arith.truncf %91 : vector<16x32xf32> to vector<16x32xbf16>
    %c5_54 = arith.constant 5 : index
    %c0_55 = arith.constant 0 : index
    %c0_56 = arith.constant 0 : index
    %93 = vector.load %arg7[%c5_54, %c0_55, %c0_56] : memref<8x16x32xbf16, #tpu.memory_space<vmem>>, vector<1x16x32xbf16>
    %94 = vector.shape_cast %93 : vector<1x16x32xbf16> to vector<16x32xbf16>
    %95 = vector.shape_cast %92 : vector<16x32xbf16> to vector<1x16x32xbf16>
    tpu.vector_store %arg7[%c5_54, %c0_55, %c0_56], %95 {strides = array<i32>} : memref<8x16x32xbf16, #tpu.memory_space<vmem>>, vector<1x16x32xbf16>,
    %96 = vector.extract_strided_slice %2 {offsets = [0, 192], sizes = [16, 32], strides = [1, 1]} : vector<16x256xf32> to vector<16x32xf32>
    %97 = arith.truncf %96 : vector<16x32xf32> to vector<16x32xbf16>
    %c6 = arith.constant 6 : index
    %c0_57 = arith.constant 0 : index
    %c0_58 = arith.constant 0 : index
    %98 = vector.load %arg5[%c6, %c0_57, %c0_58] : memref<8x16x32xbf16, #tpu.memory_space<vmem>>, vector<1x16x32xbf16>
    %99 = vector.shape_cast %98 : vector<1x16x32xbf16> to vector<16x32xbf16>
    %100 = vector.shape_cast %97 : vector<16x32xbf16> to vector<1x16x32xbf16>
    tpu.vector_store %arg5[%c6, %c0_57, %c0_58], %100 {strides = array<i32>} : memref<8x16x32xbf16, #tpu.memory_space<vmem>>, vector<1x16x32xbf16>,
    %101 = vector.extract_strided_slice %5 {offsets = [0, 192], sizes = [16, 32], strides = [1, 1]} : vector<16x512xf32> to vector<16x32xf32>
    %102 = arith.truncf %101 : vector<16x32xf32> to vector<16x32xbf16>
    %c6_59 = arith.constant 6 : index
    %c0_60 = arith.constant 0 : index
    %c0_61 = arith.constant 0 : index
    %103 = vector.load %arg6[%c6_59, %c0_60, %c0_61] : memref<8x16x32xbf16, #tpu.memory_space<vmem>>, vector<1x16x32xbf16>
    %104 = vector.shape_cast %103 : vector<1x16x32xbf16> to vector<16x32xbf16>
    %105 = vector.shape_cast %102 : vector<16x32xbf16> to vector<1x16x32xbf16>
    tpu.vector_store %arg6[%c6_59, %c0_60, %c0_61], %105 {strides = array<i32>} : memref<8x16x32xbf16, #tpu.memory_space<vmem>>, vector<1x16x32xbf16>,
    %106 = vector.extract_strided_slice %5 {offsets = [0, 448], sizes = [16, 32], strides = [1, 1]} : vector<16x512xf32> to vector<16x32xf32>
    %107 = arith.truncf %106 : vector<16x32xf32> to vector<16x32xbf16>
    %c6_62 = arith.constant 6 : index
    %c0_63 = arith.constant 0 : index
    %c0_64 = arith.constant 0 : index
    %108 = vector.load %arg7[%c6_62, %c0_63, %c0_64] : memref<8x16x32xbf16, #tpu.memory_space<vmem>>, vector<1x16x32xbf16>
    %109 = vector.shape_cast %108 : vector<1x16x32xbf16> to vector<16x32xbf16>
    %110 = vector.shape_cast %107 : vector<16x32xbf16> to vector<1x16x32xbf16>
    tpu.vector_store %arg7[%c6_62, %c0_63, %c0_64], %110 {strides = array<i32>} : memref<8x16x32xbf16, #tpu.memory_space<vmem>>, vector<1x16x32xbf16>,
    %111 = vector.extract_strided_slice %2 {offsets = [0, 224], sizes = [16, 32], strides = [1, 1]} : vector<16x256xf32> to vector<16x32xf32>
    %112 = arith.truncf %111 : vector<16x32xf32> to vector<16x32xbf16>
    %c7 = arith.constant 7 : index
    %c0_65 = arith.constant 0 : index
    %c0_66 = arith.constant 0 : index
    %113 = vector.load %arg5[%c7, %c0_65, %c0_66] : memref<8x16x32xbf16, #tpu.memory_space<vmem>>, vector<1x16x32xbf16>
    %114 = vector.shape_cast %113 : vector<1x16x32xbf16> to vector<16x32xbf16>
    %115 = vector.shape_cast %112 : vector<16x32xbf16> to vector<1x16x32xbf16>
    tpu.vector_store %arg5[%c7, %c0_65, %c0_66], %115 {strides = array<i32>} : memref<8x16x32xbf16, #tpu.memory_space<vmem>>, vector<1x16x32xbf16>,
    %116 = vector.extract_strided_slice %5 {offsets = [0, 224], sizes = [16, 32], strides = [1, 1]} : vector<16x512xf32> to vector<16x32xf32>
    %117 = arith.truncf %116 : vector<16x32xf32> to vector<16x32xbf16>
    %c7_67 = arith.constant 7 : index
    %c0_68 = arith.constant 0 : index
    %c0_69 = arith.constant 0 : index
    %118 = vector.load %arg6[%c7_67, %c0_68, %c0_69] : memref<8x16x32xbf16, #tpu.memory_space<vmem>>, vector<1x16x32xbf16>
    %119 = vector.shape_cast %118 : vector<1x16x32xbf16> to vector<16x32xbf16>
    %120 = vector.shape_cast %117 : vector<16x32xbf16> to vector<1x16x32xbf16>
    tpu.vector_store %arg6[%c7_67, %c0_68, %c0_69], %120 {strides = array<i32>} : memref<8x16x32xbf16, #tpu.memory_space<vmem>>, vector<1x16x32xbf16>,
    %121 = vector.extract_strided_slice %5 {offsets = [0, 480], sizes = [16, 32], strides = [1, 1]} : vector<16x512xf32> to vector<16x32xf32>
    %122 = arith.truncf %121 : vector<16x32xf32> to vector<16x32xbf16>
    %c7_70 = arith.constant 7 : index
    %c0_71 = arith.constant 0 : index
    %c0_72 = arith.constant 0 : index
    %123 = vector.load %arg7[%c7_70, %c0_71, %c0_72] : memref<8x16x32xbf16, #tpu.memory_space<vmem>>, vector<1x16x32xbf16>
    %124 = vector.shape_cast %123 : vector<1x16x32xbf16> to vector<16x32xbf16>
    %125 = vector.shape_cast %122 : vector<16x32xbf16> to vector<1x16x32xbf16>
    tpu.vector_store %arg7[%c7_70, %c0_71, %c0_72], %125 {strides = array<i32>} : memref<8x16x32xbf16, #tpu.memory_space<vmem>>, vector<1x16x32xbf16>,
    return
  }
  func.func @transform_0(%arg0: i32) -> (i32, i32) {
    %c0_i32 = arith.constant 0 : i32
    %c0_i32_0 = arith.constant 0 : i32
    return %arg0, %c0_i32 : i32, i32
  }
  func.func @transform_1(%arg0: i32) -> (i32, i32) {
    %c0_i32 = arith.constant 0 : i32
    %c0_i32_0 = arith.constant 0 : i32
    return %arg0, %c0_i32 : i32, i32
  }
  func.func @transform_2(%arg0: i32) -> (i32, i32) {
    %c0_i32 = arith.constant 0 : i32
    %c0_i32_0 = arith.constant 0 : i32
    %c0_i32_1 = arith.constant 0 : i32
    return %c0_i32, %c0_i32_0 : i32, i32
  }
  func.func @transform_3(%arg0: i32) -> (i32, i32) {
    %c0_i32 = arith.constant 0 : i32
    %c0_i32_0 = arith.constant 0 : i32
    %c0_i32_1 = arith.constant 0 : i32
    return %c0_i32, %c0_i32_0 : i32, i32
  }
  func.func @transform_4(%arg0: i32) -> (i32, i32, i32) {
    %c0_i32 = arith.constant 0 : i32
    %c0_i32_0 = arith.constant 0 : i32
    %c0_i32_1 = arith.constant 0 : i32
    return %c0_i32, %arg0, %c0_i32_0 : i32, i32, i32
  }
  func.func @transform_5(%arg0: i32) -> (i32, i32, i32) {
    %c0_i32 = arith.constant 0 : i32
    %c0_i32_0 = arith.constant 0 : i32
    %c0_i32_1 = arith.constant 0 : i32
    return %c0_i32, %arg0, %c0_i32_0 : i32, i32, i32
  }
  func.func @transform_6(%arg0: i32) -> (i32, i32, i32) {
    %c0_i32 = arith.constant 0 : i32
    %c0_i32_0 = arith.constant 0 : i32
    %c0_i32_1 = arith.constant 0 : i32
    return %c0_i32, %arg0, %c0_i32_0 : i32, i32, i32
  }
}

</mosaic_0001>

<llo_original>
// kernel: tpu_custom_call.1
$region0: #{tpu_custom_call.1}
  #allocation0 [shape = 'u32[]', space=smem, size = 0x4, offset = 0x4, fixed_abs, tag = 'smem constant byte address 0x4 - core index']
  #allocation1 [shape = 'u32[144,128]{1,0:T(1,128)}', space=vmem, size = 0x12000, scoped, tag = 'internal scratch']
  #allocation14 [shape = 's32[]', space=sflag, size = 0x4, offset = 0, fixed_abs, tag = 'sflag constant byte address 0x0 - dummy sync flag']
  #allocation16 [shape = 's32[]', space=sflag, size = 0x4, offset = 0, fixed_abs, tag = 'sflag constant byte address 0x0 - dummy sync flag']
  #allocation18 [shape = 's32[]', space=sflag, size = 0x4, offset = 0, fixed_abs, tag = 'sflag constant byte address 0x0 - dummy sync flag']
  %s0 = inlined_call_operand.hbm [shape: bf16[32,32], index: 0, kind: input, shape index: {}]
  %s1 = inlined_call_operand.hbm [shape: bf16[32,32], index: 1, kind: input, shape index: {}]
  %s2 = inlined_call_operand.hbm [shape: bf16[32,256], index: 2, kind: input, shape index: {}]
  %s3 = inlined_call_operand.hbm [shape: bf16[32,512], index: 3, kind: input, shape index: {}]
  %s4 = inlined_call_operand.hbm [shape: bf16[8,32,32], index: 4, kind: output, shape index: {0}]
  %s5 = inlined_call_operand.hbm [shape: bf16[8,32,32], index: 5, kind: output, shape index: {1}]
  %s6 = inlined_call_operand.hbm [shape: bf16[8,32,32], index: 6, kind: output, shape index: {2}]
  %7 = xla_tuple %s4, %s5, %s6
  %s8 = sld [smem:[#allocation0]]
  $region81: #{tpu_custom_call.1} parent=0
    _
  %s10 = ssub.s32 1, %s8
  %s11 = scalar_select 0, %s10, %s8
  $region1: #{tpu_custom_call.1} parent=0
    #allocation2 [shape = 'u8[8192]{0}', space=vmem, size = 0x2000, scoped, tag = 'input window, operand 0']
    #allocation3 [shape = 's32[2]{0}', space=sflag, size = 0x8, scoped, tag = 'scoped memory for tpu_custom_call.1']
    #allocation4 [shape = 's32[2]{0}', space=sflag, size = 0x8, scoped, tag = 'scoped memory for tpu_custom_call.1']
    #allocation5 [shape = 'u8[8192]{0}', space=vmem, size = 0x2000, scoped, tag = 'input window, operand 1']
    #allocation6 [shape = 's32[2]{0}', space=sflag, size = 0x8, scoped, tag = 'scoped memory for tpu_custom_call.1']
    #allocation7 [shape = 'u8[16384]{0}', space=vmem, size = 0x4000, scoped, tag = 'input window, operand 2, single buffered']
    #allocation8 [shape = 'u8[32768]{0}', space=vmem, size = 0x8000, scoped, tag = 'input window, operand 3, single buffered']
    #allocation9 [shape = 's32[1]{0}', space=sflag, size = 0x4, scoped, tag = 'scoped memory for tpu_custom_call.1']
    #allocation10 [shape = 'u8[65536]{0}', space=vmem, size = 0x10000, scoped, tag = 'output window, operand 0']
    #allocation11 [shape = 'u8[65536]{0}', space=vmem, size = 0x10000, scoped, tag = 'output window, operand 1']
    #allocation12 [shape = 's32[2]{0}', space=sflag, size = 0x8, scoped, tag = 'scoped memory for tpu_custom_call.1']
    #allocation13 [shape = 'u8[65536]{0}', space=vmem, size = 0x10000, scoped, tag = 'output window, operand 2']
    %12 = vsyncpa [#allocation3], 0
    %s13 = scalar_lea.sflag [#allocation3], 1
    %14 = vsyncpa %s13, 0
    %15 = vsyncpa [#allocation6], 0
    %s16 = scalar_lea.sflag [#allocation6], 1
    %17 = vsyncpa %s16, 0
    %18 = vsyncpa [#allocation9], 0
    %19 = vsyncpa [#allocation4], 0
    %s20 = scalar_lea.sflag [#allocation4], 1
    %21 = vsyncpa %s20, 0
    %22 = vsyncpa [#allocation12], 0
    %s23 = scalar_lea.sflag [#allocation12], 1
    %24 = vsyncpa %s23, 0
    loop: start=0, step=1, limit=4
    $region2: #{tpu_custom_call.1} parent=1 // loop_pre_header
      _
    $region3: #{tpu_custom_call.1} parent=1 // loop_header
      %s26 = sphi 0, %s30
      %p27 = scmp.ge.s32.totalorder %s26, 4
      %s36 = sphi 0, %s38
      %s39 = sphi 0, %s36
      %s40 = sphi 0, %s39
      %s56 = sphi 0, %s40
      %s62 = sphi 0, %s64
      %s65 = sphi 0, %s62
      %s66 = sphi 0, %s65
      %s82 = sphi 0, %s66
      %s86 = sphi 0, %s86
      %s88 = sphi 0, %s86
      %s89 = sphi 0, %s88
      %s103 = sphi 0, %s89
      %s107 = sphi 0, %s107
      %s109 = sphi 0, %s107
      %s110 = sphi 0, %s109
      %s124 = sphi 0, %s110
      %s130 = sphi 0, %s132
      %s133 = sphi 0, %s130
      %s134 = sphi 0, %s133
      %s150 = sphi 0, %s134
      %s156 = sphi 0, %s158
      %s159 = sphi 0, %s156
      %s160 = sphi 0, %s159
      %s176 = sphi 0, %s160
      %s182 = sphi 0, %s184
      %s185 = sphi 0, %s182
      %s186 = sphi 0, %s185
      %s202 = sphi 0, %s186
    $region4: #{tpu_custom_call.1} parent=1 // loop_header_branch
      %29 = sbr.rel (%p27) target = $region8
    $region5: #{tpu_custom_call.1} parent=1 // loop_body
      %s31 = ssub.s32 %s26, 1
      %s32 = ssub.s32 %s26, 2
      %s33 = sadd.s32 %s26, 1
      %s34 = ssub.s32 %s26, %s33
      %p35 = scmp.eq.s32.totalorder %s34, 0
      %s37 = sadd.s32 %s36, 1
      %s38 = scalar_select %p35, %s36, %s37
      %p41 = pneg %p35
      %p42 = scmp.eq.s32.totalorder %s26, 1
      %p43 = por %p41, %p42
      %p44 = scmp.ne.s32.totalorder %s36, %s39
      %p45 = scmp.eq.s32.totalorder %s26, 0
      %p46 = por %p44, %p45
      %p47 = scmp.ne.s32.totalorder %s36, %s39
      %p48 = scmp.eq.s32.totalorder %s31, 1
      %p49 = por %p47, %p48
      %p50 = scmp.ne.s32.totalorder %s39, %s40
      %p51 = scmp.eq.s32.totalorder %s31, 0
      %p52 = por %p50, %p51
      %p53 = scmp.ne.s32.totalorder %s39, %s40
      %p54 = scmp.eq.s32.totalorder %s32, 1
      %p55 = por %p53, %p54
      %p57 = scmp.ne.s32.totalorder %s40, %s56
      %p58 = scmp.eq.s32.totalorder %s32, 0
      %p59 = por %p57, %p58
      %s60 = ssub.s32 %s26, %s33
      %p61 = scmp.eq.s32.totalorder %s60, 0
      %s63 = sadd.s32 %s62, 1
      %s64 = scalar_select %p61, %s62, %s63
      %p67 = pneg %p61
      %p68 = scmp.eq.s32.totalorder %s26, 1
      %p69 = por %p67, %p68
      %p70 = scmp.ne.s32.totalorder %s62, %s65
      %p71 = scmp.eq.s32.totalorder %s26, 0
      %p72 = por %p70, %p71
      %p73 = scmp.ne.s32.totalorder %s62, %s65
      %p74 = scmp.eq.s32.totalorder %s31, 1
      %p75 = por %p73, %p74
      %p76 = scmp.ne.s32.totalorder %s65, %s66
      %p77 = scmp.eq.s32.totalorder %s31, 0
      %p78 = por %p76, %p77
      %p79 = scmp.ne.s32.totalorder %s65, %s66
      %p80 = scmp.eq.s32.totalorder %s32, 1
      %p81 = por %p79, %p80
      %p83 = scmp.ne.s32.totalorder %s66, %s82
      %p84 = scmp.eq.s32.totalorder %s32, 0
      %p85 = por %p83, %p84
      %s87 = sadd.s32 %s86, 1
      %p90 = scmp.eq.s32.totalorder %s26, 1
      %p91 = scmp.ne.s32.totalorder %s86, %s88
      %p92 = scmp.eq.s32.totalorder %s26, 0
      %p93 = por %p91, %p92
      %p94 = scmp.ne.s32.totalorder %s86, %s88
      %p95 = scmp.eq.s32.totalorder %s31, 1
      %p96 = por %p94, %p95
      %p97 = scmp.ne.s32.totalorder %s88, %s89
      %p98 = scmp.eq.s32.totalorder %s31, 0
      %p99 = por %p97, %p98
      %p100 = scmp.ne.s32.totalorder %s88, %s89
      %p101 = scmp.eq.s32.totalorder %s32, 1
      %p102 = por %p100, %p101
      %p104 = scmp.ne.s32.totalorder %s89, %s103
      %p105 = scmp.eq.s32.totalorder %s32, 0
      %p106 = por %p104, %p105
      %s108 = sadd.s32 %s107, 1
      %p111 = scmp.eq.s32.totalorder %s26, 1
      %p112 = scmp.ne.s32.totalorder %s107, %s109
      %p113 = scmp.eq.s32.totalorder %s26, 0
      %p114 = por %p112, %p113
      %p115 = scmp.ne.s32.totalorder %s107, %s109
      %p116 = scmp.eq.s32.totalorder %s31, 1
      %p117 = por %p115, %p116
      %p118 = scmp.ne.s32.totalorder %s109, %s110
      %p119 = scmp.eq.s32.totalorder %s31, 0
      %p120 = por %p118, %p119
      %p121 = scmp.ne.s32.totalorder %s109, %s110
      %p122 = scmp.eq.s32.totalorder %s32, 1
      %p123 = por %p121, %p122
      %p125 = scmp.ne.s32.totalorder %s110, %s124
      %p126 = scmp.eq.s32.totalorder %s32, 0
      %p127 = por %p125, %p126
      %s128 = ssub.s32 %s26, %s33
      %p129 = scmp.eq.s32.totalorder %s128, 0
      %s131 = sadd.s32 %s130, 1
      %s132 = scalar_select %p129, %s130, %s131
      %p135 = pneg %p129
      %p136 = scmp.eq.s32.totalorder %s26, 1
      %p137 = por %p135, %p136
      %p138 = scmp.ne.s32.totalorder %s130, %s133
      %p139 = scmp.eq.s32.totalorder %s26, 0
      %p140 = por %p138, %p139
      %p141 = scmp.ne.s32.totalorder %s130, %s133
      %p142 = scmp.eq.s32.totalorder %s31, 1
      %p143 = por %p141, %p142
      %p144 = scmp.ne.s32.totalorder %s133, %s134
      %p145 = scmp.eq.s32.totalorder %s31, 0
      %p146 = por %p144, %p145
      %p147 = scmp.ne.s32.totalorder %s133, %s134
      %p148 = scmp.eq.s32.totalorder %s32, 1
      %p149 = por %p147, %p148
      %p151 = scmp.ne.s32.totalorder %s134, %s150
      %p152 = scmp.eq.s32.totalorder %s32, 0
      %p153 = por %p151, %p152
      %s154 = ssub.s32 %s26, %s33
      %p155 = scmp.eq.s32.totalorder %s154, 0
      %s157 = sadd.s32 %s156, 1
      %s158 = scalar_select %p155, %s156, %s157
      %p161 = pneg %p155
      %p162 = scmp.eq.s32.totalorder %s26, 1
      %p163 = por %p161, %p162
      %p164 = scmp.ne.s32.totalorder %s156, %s159
      %p165 = scmp.eq.s32.totalorder %s26, 0
      %p166 = por %p164, %p165
      %p167 = scmp.ne.s32.totalorder %s156, %s159
      %p168 = scmp.eq.s32.totalorder %s31, 1
      %p169 = por %p167, %p168
      %p170 = scmp.ne.s32.totalorder %s159, %s160
      %p171 = scmp.eq.s32.totalorder %s31, 0
      %p172 = por %p170, %p171
      %p173 = scmp.ne.s32.totalorder %s159, %s160
      %p174 = scmp.eq.s32.totalorder %s32, 1
      %p175 = por %p173, %p174
      %p177 = scmp.ne.s32.totalorder %s160, %s176
      %p178 = scmp.eq.s32.totalorder %s32, 0
      %p179 = por %p177, %p178
      %s180 = ssub.s32 %s26, %s33
      %p181 = scmp.eq.s32.totalorder %s180, 0
      %s183 = sadd.s32 %s182, 1
      %s184 = scalar_select %p181, %s182, %s183
      %p187 = pneg %p181
      %p188 = scmp.eq.s32.totalorder %s26, 1
      %p189 = por %p187, %p188
      %p190 = scmp.ne.s32.totalorder %s182, %s185
      %p191 = scmp.eq.s32.totalorder %s26, 0
      %p192 = por %p190, %p191
      %p193 = scmp.ne.s32.totalorder %s182, %s185
      %p194 = scmp.eq.s32.totalorder %s31, 1
      %p195 = por %p193, %p194
      %p196 = scmp.ne.s32.totalorder %s185, %s186
      %p197 = scmp.eq.s32.totalorder %s31, 0
      %p198 = por %p196, %p197
      %p199 = scmp.ne.s32.totalorder %s185, %s186
      %p200 = scmp.eq.s32.totalorder %s32, 1
      %p201 = por %p199, %p200
      %p203 = scmp.ne.s32.totalorder %s186, %s202
      %p204 = scmp.eq.s32.totalorder %s32, 0
      %p205 = por %p203, %p204
      %p206 = scmp.le.s32.totalorder 1, %s26
      %p207 = scmp.lt.s32.totalorder %s26, 3
      %p208 = pnand %p206, %p207
      %p209 = pneg %p208
      // Predicated region
      $region9: #{tpu_custom_call.1} parent=5 // pred_check
        _
      $region10: #{tpu_custom_call.1} parent=5 // pred_check_branch
        %211 = sbr.rel (%p208) target = $region12
      $region11: #{tpu_custom_call.1} parent=5 // pred_region
        %s212 = ssub.s32 %s26, 1
        // Predicated region
        $region13: #{tpu_custom_call.1} parent=11 // pred_check
          %p213 = pneg %p99
        $region14: #{tpu_custom_call.1} parent=11 // pred_check_branch
          %215 = sbr.rel (%p213) target = $region16
        $region15: #{tpu_custom_call.1} parent=11 // pred_region
          %s217 = ssub.s32 512, 512
          %218 = vsyncadd [#allocation6], %s217
          %s219 = sshll.u32 [#allocation7], 4
          %s220 = int_to_ptr.vmem [resolvable:$true] %s219
          %225 = dma.hbm_to_vmem [thread:$0]  %s2, 512, %s220, [#allocation6], 128, 128, 8
        $region16: #{tpu_custom_call.1} parent=11 // pred_fallthru
          _
        // Predicated region
        $region17: #{tpu_custom_call.1} parent=11 // pred_check
          %p226 = pneg %p120
        $region18: #{tpu_custom_call.1} parent=11 // pred_check_branch
          %228 = sbr.rel (%p226) target = $region20
        $region19: #{tpu_custom_call.1} parent=11 // pred_region
          %s230 = ssub.s32 1024, 1024
          %231 = vsyncadd [#allocation9], %s230
          %s232 = sshll.u32 [#allocation8], 4
          %s233 = int_to_ptr.vmem [resolvable:$true] %s232
          %238 = dma.hbm_to_vmem [thread:$0]  %s3, 1024, %s233, [#allocation9], 256, 256, 16
        $region20: #{tpu_custom_call.1} parent=11 // pred_fallthru
          _
      $region12: #{tpu_custom_call.1} parent=5 // pred_fallthru
        _
      %p239 = scmp.lt.s32.totalorder %s26, 2
      // Predicated region
      $region21: #{tpu_custom_call.1} parent=5 // pred_check
        %p240 = pneg %p239
      $region22: #{tpu_custom_call.1} parent=5 // pred_check_branch
        %242 = sbr.rel (%p240) target = $region24
      $region23: #{tpu_custom_call.1} parent=5 // pred_region
        // Predicated region
        $region25: #{tpu_custom_call.1} parent=23 // pred_check
          %p243 = pneg %p46
        $region26: #{tpu_custom_call.1} parent=23 // pred_check_branch
          %245 = sbr.rel (%p243) target = $region28
        $region27: #{tpu_custom_call.1} parent=23 // pred_region
          %s246 = sand.u32 %s36, 1
          %s247 = scalar_lea.sflag [#allocation3], %s246
          %s248 = sand.u32 %s36, 1
          %s249 = smul.addr %s248, 8
          %s250 = scalar_lea.vmem [#allocation2], %s249
          %s251 = smul.u32 2, %s26
          %s253 = ssub.s32 128, 128
          %254 = vsyncadd %s247, %s253
          %s255 = smul.addr %s251, 64
          %s256 = scalar_lea.hbm %s0, %s255
          %s257 = sshll.u32 %s250, 4
          %s258 = int_to_ptr.vmem [resolvable:$true] %s257
          %263 = dma.hbm_to_vmem [thread:$0]  %s256, 128, %s258, %s247, 64, 64, 4
        $region28: #{tpu_custom_call.1} parent=23 // pred_fallthru
          _
        // Predicated region
        $region29: #{tpu_custom_call.1} parent=23 // pred_check
          %p264 = pneg %p72
        $region30: #{tpu_custom_call.1} parent=23 // pred_check_branch
          %266 = sbr.rel (%p264) target = $region32
        $region31: #{tpu_custom_call.1} parent=23 // pred_region
          %s267 = sand.u32 %s26, 1
          %s268 = scalar_lea.sflag [#allocation6], %s267
          %s269 = sand.u32 %s62, 1
          %s270 = smul.addr %s269, 8
          %s271 = scalar_lea.vmem [#allocation5], %s270
          %s272 = smul.u32 2, %s26
          %s274 = ssub.s32 128, 128
          %275 = vsyncadd %s268, %s274
          %s276 = smul.addr %s272, 64
          %s277 = scalar_lea.hbm %s1, %s276
          %s278 = sshll.u32 %s271, 4
          %s279 = int_to_ptr.vmem [resolvable:$true] %s278
          %284 = dma.hbm_to_vmem [thread:$0]  %s277, 128, %s279, %s268, 64, 64, 4
        $region32: #{tpu_custom_call.1} parent=23 // pred_fallthru
          _
      $region24: #{tpu_custom_call.1} parent=5 // pred_fallthru
        _
      %p285 = scmp.le.s32.totalorder 1, %s26
      %p286 = scmp.lt.s32.totalorder %s26, 3
      %p287 = pnand %p285, %p286
      %p288 = pneg %p287
      // Predicated region
      $region33: #{tpu_custom_call.1} parent=5 // pred_check
        _
      $region34: #{tpu_custom_call.1} parent=5 // pred_check_branch
        %290 = sbr.rel (%p287) target = $region36
      $region35: #{tpu_custom_call.1} parent=5 // pred_region
        %s291 = ssub.s32 %s26, 1
        %s292 = sand.u32 %s39, 1
        %s293 = scalar_lea.sflag [#allocation3], %s292
        %s294 = sand.u32 %s39, 1
        %s295 = smul.addr %s294, 8
        %s296 = scalar_lea.vmem [#allocation2], %s295
        // Predicated region
        $region37: #{tpu_custom_call.1} parent=35 // pred_check
          %p297 = pneg %p52
        $region38: #{tpu_custom_call.1} parent=35 // pred_check_branch
          %299 = sbr.rel (%p297) target = $region40
        $region39: #{tpu_custom_call.1} parent=35 // pred_region
          %300 = dma.done %s293, 128
        $region40: #{tpu_custom_call.1} parent=35 // pred_fallthru
          _
        %s301 = sand.u32 %s31, 1
        %s302 = scalar_lea.sflag [#allocation6], %s301
        %s303 = sand.u32 %s65, 1
        %s304 = smul.addr %s303, 8
        %s305 = scalar_lea.vmem [#allocation5], %s304
        // Predicated region
        $region41: #{tpu_custom_call.1} parent=35 // pred_check
          %p306 = pneg %p78
        $region42: #{tpu_custom_call.1} parent=35 // pred_check_branch
          %308 = sbr.rel (%p306) target = $region44
        $region43: #{tpu_custom_call.1} parent=35 // pred_region
          %309 = dma.done %s302, 128
        $region44: #{tpu_custom_call.1} parent=35 // pred_fallthru
          _
        // Predicated region
        $region45: #{tpu_custom_call.1} parent=35 // pred_check
          %p310 = pneg %p99
        $region46: #{tpu_custom_call.1} parent=35 // pred_check_branch
          %312 = sbr.rel (%p310) target = $region48
        $region47: #{tpu_custom_call.1} parent=35 // pred_region
          %313 = dma.done [#allocation6], 512
        $region48: #{tpu_custom_call.1} parent=35 // pred_fallthru
          _
        // Predicated region
        $region49: #{tpu_custom_call.1} parent=35 // pred_check
          %p314 = pneg %p120
        $region50: #{tpu_custom_call.1} parent=35 // pred_check_branch
          %316 = sbr.rel (%p314) target = $region52
        $region51: #{tpu_custom_call.1} parent=35 // pred_region
          %317 = dma.done [#allocation9], 1024
        $region52: #{tpu_custom_call.1} parent=35 // pred_fallthru
          _
        %s318 = sand.u32 %s39, 1
        %s319 = scalar_lea.sflag [#allocation3], %s318
        %s320 = sand.u32 %s39, 1
        %s321 = smul.addr %s320, 8
        %s322 = scalar_lea.vmem [#allocation2], %s321
        %p323 = pneg %p52
        %p324 = pneg %p49
        %s325 = sand.u32 %s31, 1
        %s326 = scalar_lea.sflag [#allocation6], %s325
        %s327 = sand.u32 %s65, 1
        %s328 = smul.addr %s327, 8
        %s329 = scalar_lea.vmem [#allocation5], %s328
        %p330 = pneg %p78
        %p331 = pneg %p75
        %p332 = pneg %p99
        %p333 = pneg %p96
        %p334 = pneg %p120
        %p335 = pneg %p117
        %p336 = pneg %p146
        %p337 = pneg %p143
        %s338 = sand.u32 %s133, 1
        %s339 = scalar_lea.sflag [#allocation4], %s338
        %s340 = sand.u32 %s133, 1
        %s341 = smul.addr %s340, 64
        %s342 = scalar_lea.vmem [#allocation10], %s341
        %p343 = pneg %p172
        %p344 = pneg %p169
        %s345 = sand.u32 %s31, 1
        %s346 = scalar_lea.sflag [#allocation12], %s345
        %s347 = sand.u32 %s159, 1
        %s348 = smul.addr %s347, 64
        %s349 = scalar_lea.vmem [#allocation11], %s348
        %p350 = pneg %p198
        %p351 = pneg %p195
        %s352 = sand.u32 %s31, 1
        %s353 = scalar_lea.sflag [#allocation12], %s352
        %s354 = sand.u32 %s185, 1
        %s355 = smul.addr %s354, 64
        %s356 = scalar_lea.vmem [#allocation13], %s355
        %s357 = smul.u32 2, %s31
        %s358 = smul.u32 2, %s31
        %s359 = smul.u32 2, %s31
        %s360 = smul.u32 2, %s31
        %s361 = smul.u32 2, %s31
        %v363 = vld [vmem:[%s296] sm:$0xf]
        %v364 = vld [vmem:[%s296 + $0x4] sm:$0xf]
        %v365 = vld [vmem:[#allocation7] sm:$0xff]
        %v366 = vld [vmem:[#allocation7 + $0x8] sm:$0xff]
        %v367 = vld [vmem:[#allocation7 + $0x10] sm:$0xff]
        %v368 = vld [vmem:[#allocation7 + $0x18] sm:$0xff]
        %v371 = vunpack.c.l.b16 %v363
        %v372 = vunpack.c.l.b16 %v364
        %v373 = vpack.c.b16 %v372, %v371
        %v378 = vunpack.c.l.b16 %v365
        %v379 = vunpack.c.h.b16 %v365
        %v380 = vunpack.c.l.b16 %v366
        %v381 = vunpack.c.h.b16 %v366
        %v382 = vunpack.c.l.b16 %v367
        %v383 = vunpack.c.h.b16 %v367
        %v384 = vunpack.c.l.b16 %v368
        %v385 = vunpack.c.h.b16 %v368
        %v386 = vpack.c.b16 %v380, %v378
        %v387 = vpack.c.b16 %v381, %v379
        %v388 = vpack.c.b16 %v384, %v382
        %v389 = vpack.c.b16 %v385, %v383
        %vm394 = vcmask 261120
        %v396 = vsel %vm394, %v373, 0
        %398 = vmatprep.subr.bf16.mxu0 %v387
        %399 = vmatpush1.bf16.msra.mxu0 %v386
        %400 = vmatprep.subr.bf16.mxu0 %v389
        %401 = vmatpush1.bf16.msra.mxu0 %v388
        %402 = vmatprep.subr.bf16.mxu0 0
        %403 = vmatpush1.bf16.msra.mxu0 0
        %404 = vmatprep.subr.bf16.mxu0 0
        %405 = vmatpush1.bf16.msra.mxu0 0
        %406 = vmatprep.subr.bf16.mxu0 0
        %407 = vmatpush1.bf16.msra.mxu0 0
        %408 = vmatprep.subr.bf16.mxu0 0
        %409 = vmatpush1.bf16.msra.mxu0 0
        %410 = vmatprep.subr.bf16.mxu0 0
        %411 = vmatpush1.bf16.msra.mxu0 0
        %412 = vmatprep.subr.bf16.mxu0 0
        %413 = vmatpush1.bf16.msra.mxu0 0
        %414 = vmatprep.subr.bf16.mxu0 0
        %415 = vmatpush1.bf16.msra.mxu0 0
        %416 = vmatprep.subr.bf16.mxu0 0
        %417 = vmatpush1.bf16.msra.mxu0 0
        %418 = vmatprep.subr.bf16.mxu0 0
        %419 = vmatpush1.bf16.msra.mxu0 0
        %420 = vmatprep.subr.bf16.mxu0 0
        %421 = vmatpush1.bf16.msra.mxu0 0
        %422 = vmatprep.subr.bf16.mxu0 0
        %423 = vmatpush1.bf16.msra.mxu0 0
        %424 = vmatprep.subr.bf16.mxu0 0
        %425 = vmatpush1.bf16.msra.mxu0 0
        %426 = vmatprep.subr.bf16.mxu0 0
        %427 = vmatpush1.bf16.msra.mxu0 0
        %428 = vmatprep.subr.bf16.mxu0 0
        %429 = vmatpush1.bf16.msra.mxu0 0
        %430 = vmatprep.mubr.bf16.mxu0 0
        %431 = vmatmul.mubr.bf16.gmra.mrb[0].mxu0 %v396
        %v432 = vpop.f32.mrb[0].mxu0
        %v433 = vadd.f32 0.0, %v432
        %v434 = vpop.f32.mrb[0].mxu0
        %v435 = vadd.f32 0.0, %v434
        %v436 = vpop.f32.mrb[0].mxu0
        %v437 = vadd.f32 0.0, %v436
        %v438 = vpop.f32.mrb[0].mxu0
        %v439 = vadd.f32 0.0, %v438
        %440 = vdwg.mxu0
        %v441 = vld [vmem:[%s305] sm:$0xf]
        %v442 = vld [vmem:[%s305 + $0x4] sm:$0xf]
        %v443 = vld [vmem:[#allocation8] sm:$0xff]
        %v444 = vld [vmem:[#allocation8 + $0x8] sm:$0xff]
        %v445 = vld [vmem:[#allocation8 + $0x10] sm:$0xff]
        %v446 = vld [vmem:[#allocation8 + $0x18] sm:$0xff]
        %v447 = vld [vmem:[#allocation8 + $0x20] sm:$0xff]
        %v448 = vld [vmem:[#allocation8 + $0x28] sm:$0xff]
        %v449 = vld [vmem:[#allocation8 + $0x30] sm:$0xff]
        %v450 = vld [vmem:[#allocation8 + $0x38] sm:$0xff]
        %v453 = vunpack.c.l.b16 %v441
        %v454 = vunpack.c.l.b16 %v442
        %v455 = vpack.c.b16 %v454, %v453
        %v464 = vunpack.c.l.b16 %v443
        %v465 = vunpack.c.h.b16 %v443
        %v466 = vunpack.c.l.b16 %v444
        %v467 = vunpack.c.h.b16 %v444
        %v468 = vunpack.c.l.b16 %v445
        %v469 = vunpack.c.h.b16 %v445
        %v470 = vunpack.c.l.b16 %v446
        %v471 = vunpack.c.h.b16 %v446
        %v472 = vunpack.c.l.b16 %v447
        %v473 = vunpack.c.h.b16 %v447
        %v474 = vunpack.c.l.b16 %v448
        %v475 = vunpack.c.h.b16 %v448
        %v476 = vunpack.c.l.b16 %v449
        %v477 = vunpack.c.h.b16 %v449
        %v478 = vunpack.c.l.b16 %v450
        %v479 = vunpack.c.h.b16 %v450
        %v480 = vpack.c.b16 %v468, %v464
        %v481 = vpack.c.b16 %v469, %v465
        %v482 = vpack.c.b16 %v470, %v466
        %v483 = vpack.c.b16 %v471, %v467
        %v484 = vpack.c.b16 %v476, %v472
        %v485 = vpack.c.b16 %v477, %v473
        %v486 = vpack.c.b16 %v478, %v474
        %v487 = vpack.c.b16 %v479, %v475
        %v497 = vsel %vm394, %v455, 0
        %499 = vmatprep.subr.bf16.mxu0 %v481
        %500 = vmatpush1.bf16.msra.mxu0 %v480
        %501 = vmatprep.subr.bf16.mxu0 %v485
        %502 = vmatpush1.bf16.msra.mxu0 %v484
        %503 = vmatprep.subr.bf16.mxu0 0
        %504 = vmatpush1.bf16.msra.mxu0 0
        %505 = vmatprep.subr.bf16.mxu0 0
        %506 = vmatpush1.bf16.msra.mxu0 0
        %507 = vmatprep.subr.bf16.mxu0 0
        %508 = vmatpush1.bf16.msra.mxu0 0
        %509 = vmatprep.subr.bf16.mxu0 0
        %510 = vmatpush1.bf16.msra.mxu0 0
        %511 = vmatprep.subr.bf16.mxu0 0
        %512 = vmatpush1.bf16.msra.mxu0 0
        %513 = vmatprep.subr.bf16.mxu0 0
        %514 = vmatpush1.bf16.msra.mxu0 0
        %515 = vmatprep.subr.bf16.mxu0 0
        %516 = vmatpush1.bf16.msra.mxu0 0
        %517 = vmatprep.subr.bf16.mxu0 0
        %518 = vmatpush1.bf16.msra.mxu0 0
        %519 = vmatprep.subr.bf16.mxu0 0
        %520 = vmatpush1.bf16.msra.mxu0 0
        %521 = vmatprep.subr.bf16.mxu0 0
        %522 = vmatpush1.bf16.msra.mxu0 0
        %523 = vmatprep.subr.bf16.mxu0 0
        %524 = vmatpush1.bf16.msra.mxu0 0
        %525 = vmatprep.subr.bf16.mxu0 0
        %526 = vmatpush1.bf16.msra.mxu0 0
        %527 = vmatprep.subr.bf16.mxu0 0
        %528 = vmatpush1.bf16.msra.mxu0 0
        %529 = vmatprep.subr.bf16.mxu0 0
        %530 = vmatpush1.bf16.msra.mxu0 0
        %531 = vmatprep.mubr.bf16.mxu0 0
        %532 = vmatmul.mubr.bf16.gmra.mrb[0].mxu0 %v497
        %v533 = vpop.f32.mrb[0].mxu0
        %v534 = vadd.f32 0.0, %v533
        %v535 = vpop.f32.mrb[0].mxu0
        %v536 = vadd.f32 0.0, %v535
        %v537 = vpop.f32.mrb[0].mxu0
        %v538 = vadd.f32 0.0, %v537
        %v539 = vpop.f32.mrb[0].mxu0
        %v540 = vadd.f32 0.0, %v539
        %541 = vdwg.mxu0
        %542 = vmatprep.subr.bf16.mxu0 %v483
        %543 = vmatpush1.bf16.msra.mxu0 %v482
        %544 = vmatprep.subr.bf16.mxu0 %v487
        %545 = vmatpush1.bf16.msra.mxu0 %v486
        %546 = vmatprep.subr.bf16.mxu0 0
        %547 = vmatpush1.bf16.msra.mxu0 0
        %548 = vmatprep.subr.bf16.mxu0 0
        %549 = vmatpush1.bf16.msra.mxu0 0
        %550 = vmatprep.subr.bf16.mxu0 0
        %551 = vmatpush1.bf16.msra.mxu0 0
        %552 = vmatprep.subr.bf16.mxu0 0
        %553 = vmatpush1.bf16.msra.mxu0 0
        %554 = vmatprep.subr.bf16.mxu0 0
        %555 = vmatpush1.bf16.msra.mxu0 0
        %556 = vmatprep.subr.bf16.mxu0 0
        %557 = vmatpush1.bf16.msra.mxu0 0
        %558 = vmatprep.subr.bf16.mxu0 0
        %559 = vmatpush1.bf16.msra.mxu0 0
        %560 = vmatprep.subr.bf16.mxu0 0
        %561 = vmatpush1.bf16.msra.mxu0 0
        %562 = vmatprep.subr.bf16.mxu0 0
        %563 = vmatpush1.bf16.msra.mxu0 0
        %564 = vmatprep.subr.bf16.mxu0 0
        %565 = vmatpush1.bf16.msra.mxu0 0
        %566 = vmatprep.subr.bf16.mxu0 0
        %567 = vmatpush1.bf16.msra.mxu0 0
        %568 = vmatprep.subr.bf16.mxu0 0
        %569 = vmatpush1.bf16.msra.mxu0 0
        %570 = vmatprep.subr.bf16.mxu0 0
        %571 = vmatpush1.bf16.msra.mxu0 0
        %572 = vmatprep.subr.bf16.mxu0 0
        %573 = vmatpush1.bf16.msra.mxu0 0
        %574 = vmatprep.mubr.bf16.mxu0 0
        %575 = vmatmul.mubr.bf16.gmra.mrb[0].mxu0 %v497
        %v576 = vpop.f32.mrb[0].mxu0
        %v577 = vadd.f32 0.0, %v576
        %v578 = vpop.f32.mrb[0].mxu0
        %v579 = vadd.f32 0.0, %v578
        %v580 = vpop.f32.mrb[0].mxu0
        %v581 = vadd.f32 0.0, %v580
        %v582 = vpop.f32.mrb[0].mxu0
        %v583 = vadd.f32 0.0, %v582
        %584 = vdwg.mxu0
        %v585 = vpack.c.bf16 %v437, %v433
        %v587 = vunpack.c.l.b16 %v585
        %v588 = vunpack.c.h.b16 %v585
        %v589 = vpack.c.b16 %v587, %v587
        %v590 = vpack.c.b16 %v588, %v588
        %vm593 = vcmask 257024
        %594 = vst.msk [vmem:[%s342] sm:$0xf] %vm593, %v589
        %595 = vst.msk [vmem:[%s342 + $0x4] sm:$0xf] %vm593, %v590
        %v596 = vpack.c.bf16 %v538, %v534
        %v598 = vunpack.c.l.b16 %v596
        %v599 = vunpack.c.h.b16 %v596
        %v600 = vpack.c.b16 %v598, %v598
        %v601 = vpack.c.b16 %v599, %v599
        %604 = vst.msk [vmem:[%s349] sm:$0xf] %vm593, %v600
        %605 = vst.msk [vmem:[%s349 + $0x4] sm:$0xf] %vm593, %v601
        %v606 = vpack.c.bf16 %v581, %v577
        %v608 = vunpack.c.l.b16 %v606
        %v609 = vunpack.c.h.b16 %v606
        %v610 = vpack.c.b16 %v608, %v608
        %v611 = vpack.c.b16 %v609, %v609
        %614 = vst.msk [vmem:[%s356] sm:$0xf] %vm593, %v610
        %615 = vst.msk [vmem:[%s356 + $0x4] sm:$0xf] %vm593, %v611
        %616 = vrot.lane.b32.xlu0 %v589, 96
        %v617 = vpop.permute.xlu0 %616
        %618 = vrot.lane.b32.xlu0 %v590, 96
        %v619 = vpop.permute.xlu0 %618
        %s622 = scalar_lea.vmem %s342, 8 [#allocation10]
        %623 = vst.msk [vmem:[%s622] sm:$0xf] %vm593, %v617
        %624 = vst.msk [vmem:[%s622 + $0x4] sm:$0xf] %vm593, %v619
        %625 = vrot.lane.b32.xlu0 %v600, 96
        %v626 = vpop.permute.xlu0 %625
        %627 = vrot.lane.b32.xlu0 %v601, 96
        %v628 = vpop.permute.xlu0 %627
        %s631 = scalar_lea.vmem %s349, 8 [#allocation11]
        %632 = vst.msk [vmem:[%s631] sm:$0xf] %vm593, %v626
        %633 = vst.msk [vmem:[%s631 + $0x4] sm:$0xf] %vm593, %v628
        %634 = vrot.lane.b32.xlu0 %v610, 96
        %v635 = vpop.permute.xlu0 %634
        %636 = vrot.lane.b32.xlu0 %v611, 96
        %v637 = vpop.permute.xlu0 %636
        %s640 = scalar_lea.vmem %s356, 8 [#allocation13]
        %641 = vst.msk [vmem:[%s640] sm:$0xf] %vm593, %v635
        %642 = vst.msk [vmem:[%s640 + $0x4] sm:$0xf] %vm593, %v637
        %643 = vrot.lane.b32.xlu0 %v589, 64
        %v644 = vpop.permute.xlu0 %643
        %645 = vrot.lane.b32.xlu0 %v590, 64
        %v646 = vpop.permute.xlu0 %645
        %s649 = scalar_lea.vmem %s342, 16 [#allocation10]
        %650 = vst.msk [vmem:[%s649] sm:$0xf] %vm593, %v644
        %651 = vst.msk [vmem:[%s649 + $0x4] sm:$0xf] %vm593, %v646
        %652 = vrot.lane.b32.xlu0 %v600, 64
        %v653 = vpop.permute.xlu0 %652
        %654 = vrot.lane.b32.xlu0 %v601, 64
        %v655 = vpop.permute.xlu0 %654
        %s658 = scalar_lea.vmem %s349, 16 [#allocation11]
        %659 = vst.msk [vmem:[%s658] sm:$0xf] %vm593, %v653
        %660 = vst.msk [vmem:[%s658 + $0x4] sm:$0xf] %vm593, %v655
        %661 = vrot.lane.b32.xlu0 %v610, 64
        %v662 = vpop.permute.xlu0 %661
        %663 = vrot.lane.b32.xlu0 %v611, 64
        %v664 = vpop.permute.xlu0 %663
        %s667 = scalar_lea.vmem %s356, 16 [#allocation13]
        %668 = vst.msk [vmem:[%s667] sm:$0xf] %vm593, %v662
        %669 = vst.msk [vmem:[%s667 + $0x4] sm:$0xf] %vm593, %v664
        %670 = vrot.lane.b32.xlu0 %v589, 32
        %v671 = vpop.permute.xlu0 %670
        %672 = vrot.lane.b32.xlu0 %v590, 32
        %v673 = vpop.permute.xlu0 %672
        %s676 = scalar_lea.vmem %s342, 24 [#allocation10]
        %677 = vst.msk [vmem:[%s676] sm:$0xf] %vm593, %v671
        %678 = vst.msk [vmem:[%s676 + $0x4] sm:$0xf] %vm593, %v673
        %679 = vrot.lane.b32.xlu0 %v600, 32
        %v680 = vpop.permute.xlu0 %679
        %681 = vrot.lane.b32.xlu0 %v601, 32
        %v682 = vpop.permute.xlu0 %681
        %s685 = scalar_lea.vmem %s349, 24 [#allocation11]
        %686 = vst.msk [vmem:[%s685] sm:$0xf] %vm593, %v680
        %687 = vst.msk [vmem:[%s685 + $0x4] sm:$0xf] %vm593, %v682
        %688 = vrot.lane.b32.xlu0 %v610, 32
        %v689 = vpop.permute.xlu0 %688
        %690 = vrot.lane.b32.xlu0 %v611, 32
        %v691 = vpop.permute.xlu0 %690
        %s694 = scalar_lea.vmem %s356, 24 [#allocation13]
        %695 = vst.msk [vmem:[%s694] sm:$0xf] %vm593, %v689
        %696 = vst.msk [vmem:[%s694 + $0x4] sm:$0xf] %vm593, %v691
        %v697 = vpack.c.bf16 %v439, %v435
        %v699 = vunpack.c.l.b16 %v697
        %v700 = vunpack.c.h.b16 %v697
        %v701 = vpack.c.b16 %v699, %v699
        %v702 = vpack.c.b16 %v700, %v700
        %s705 = scalar_lea.vmem %s342, 32 [#allocation10]
        %706 = vst.msk [vmem:[%s705] sm:$0xf] %vm593, %v701
        %707 = vst.msk [vmem:[%s705 + $0x4] sm:$0xf] %vm593, %v702
        %v708 = vpack.c.bf16 %v540, %v536
        %v710 = vunpack.c.l.b16 %v708
        %v711 = vunpack.c.h.b16 %v708
        %v712 = vpack.c.b16 %v710, %v710
        %v713 = vpack.c.b16 %v711, %v711
        %s716 = scalar_lea.vmem %s349, 32 [#allocation11]
        %717 = vst.msk [vmem:[%s716] sm:$0xf] %vm593, %v712
        %718 = vst.msk [vmem:[%s716 + $0x4] sm:$0xf] %vm593, %v713
        %v719 = vpack.c.bf16 %v583, %v579
        %v721 = vunpack.c.l.b16 %v719
        %v722 = vunpack.c.h.b16 %v719
        %v723 = vpack.c.b16 %v721, %v721
        %v724 = vpack.c.b16 %v722, %v722
        %s727 = scalar_lea.vmem %s356, 32 [#allocation13]
        %728 = vst.msk [vmem:[%s727] sm:$0xf] %vm593, %v723
        %729 = vst.msk [vmem:[%s727 + $0x4] sm:$0xf] %vm593, %v724
        %730 = vrot.lane.b32.xlu0 %v701, 96
        %v731 = vpop.permute.xlu0 %730
        %732 = vrot.lane.b32.xlu0 %v702, 96
        %v733 = vpop.permute.xlu0 %732
        %s736 = scalar_lea.vmem %s342, 40 [#allocation10]
        %737 = vst.msk [vmem:[%s736] sm:$0xf] %vm593, %v731
        %738 = vst.msk [vmem:[%s736 + $0x4] sm:$0xf] %vm593, %v733
        %739 = vrot.lane.b32.xlu0 %v712, 96
        %v740 = vpop.permute.xlu0 %739
        %741 = vrot.lane.b32.xlu0 %v713, 96
        %v742 = vpop.permute.xlu0 %741
        %s745 = scalar_lea.vmem %s349, 40 [#allocation11]
        %746 = vst.msk [vmem:[%s745] sm:$0xf] %vm593, %v740
        %747 = vst.msk [vmem:[%s745 + $0x4] sm:$0xf] %vm593, %v742
        %748 = vrot.lane.b32.xlu0 %v723, 96
        %v749 = vpop.permute.xlu0 %748
        %750 = vrot.lane.b32.xlu0 %v724, 96
        %v751 = vpop.permute.xlu0 %750
        %s754 = scalar_lea.vmem %s356, 40 [#allocation13]
        %755 = vst.msk [vmem:[%s754] sm:$0xf] %vm593, %v749
        %756 = vst.msk [vmem:[%s754 + $0x4] sm:$0xf] %vm593, %v751
        %757 = vrot.lane.b32.xlu0 %v701, 64
        %v758 = vpop.permute.xlu0 %757
        %759 = vrot.lane.b32.xlu0 %v702, 64
        %v760 = vpop.permute.xlu0 %759
        %s763 = scalar_lea.vmem %s342, 48 [#allocation10]
        %764 = vst.msk [vmem:[%s763] sm:$0xf] %vm593, %v758
        %765 = vst.msk [vmem:[%s763 + $0x4] sm:$0xf] %vm593, %v760
        %766 = vrot.lane.b32.xlu0 %v712, 64
        %v767 = vpop.permute.xlu0 %766
        %768 = vrot.lane.b32.xlu0 %v713, 64
        %v769 = vpop.permute.xlu0 %768
        %s772 = scalar_lea.vmem %s349, 48 [#allocation11]
        %773 = vst.msk [vmem:[%s772] sm:$0xf] %vm593, %v767
        %774 = vst.msk [vmem:[%s772 + $0x4] sm:$0xf] %vm593, %v769
        %775 = vrot.lane.b32.xlu0 %v723, 64
        %v776 = vpop.permute.xlu0 %775
        %777 = vrot.lane.b32.xlu0 %v724, 64
        %v778 = vpop.permute.xlu0 %777
        %s781 = scalar_lea.vmem %s356, 48 [#allocation13]
        %782 = vst.msk [vmem:[%s781] sm:$0xf] %vm593, %v776
        %783 = vst.msk [vmem:[%s781 + $0x4] sm:$0xf] %vm593, %v778
        %784 = vrot.lane.b32.xlu0 %v701, 32
        %v785 = vpop.permute.xlu0 %784
        %786 = vrot.lane.b32.xlu0 %v702, 32
        %v787 = vpop.permute.xlu0 %786
        %s790 = scalar_lea.vmem %s342, 56 [#allocation10]
        %791 = vst.msk [vmem:[%s790] sm:$0xf] %vm593, %v785
        %792 = vst.msk [vmem:[%s790 + $0x4] sm:$0xf] %vm593, %v787
        %793 = vrot.lane.b32.xlu0 %v712, 32
        %v794 = vpop.permute.xlu0 %793
        %795 = vrot.lane.b32.xlu0 %v713, 32
        %v796 = vpop.permute.xlu0 %795
        %s799 = scalar_lea.vmem %s349, 56 [#allocation11]
        %800 = vst.msk [vmem:[%s799] sm:$0xf] %vm593, %v794
        %801 = vst.msk [vmem:[%s799 + $0x4] sm:$0xf] %vm593, %v796
        %802 = vrot.lane.b32.xlu0 %v723, 32
        %v803 = vpop.permute.xlu0 %802
        %804 = vrot.lane.b32.xlu0 %v724, 32
        %v805 = vpop.permute.xlu0 %804
        %s808 = scalar_lea.vmem %s356, 56 [#allocation13]
        %809 = vst.msk [vmem:[%s808] sm:$0xf] %vm593, %v803
        %810 = vst.msk [vmem:[%s808 + $0x4] sm:$0xf] %vm593, %v805
        %s811 = sand.u32 %s133, 1
        %s812 = scalar_lea.sflag [#allocation4], %s811
        %s813 = sand.u32 %s133, 1
        %s814 = smul.addr %s813, 64
        %s815 = scalar_lea.vmem [#allocation10], %s814
        %s816 = sand.u32 %s31, 1
        %s817 = scalar_lea.sflag [#allocation12], %s816
        %s818 = sand.u32 %s159, 1
        %s819 = smul.addr %s818, 64
        %s820 = scalar_lea.vmem [#allocation11], %s819
        %s821 = sand.u32 %s31, 1
        %s822 = scalar_lea.sflag [#allocation12], %s821
        %s823 = sand.u32 %s185, 1
        %s824 = smul.addr %s823, 64
        %s825 = scalar_lea.vmem [#allocation13], %s824
        // Predicated region
        $region53: #{tpu_custom_call.1} parent=35 // pred_check
          %p826 = pneg %p143
        $region54: #{tpu_custom_call.1} parent=35 // pred_check_branch
          %828 = sbr.rel (%p826) target = $region56
        $region55: #{tpu_custom_call.1} parent=35 // pred_region
          #allocation15 [shape = 'u32[6]{0}', space=smem, size = 0x18, scoped, tag = 'DMA stride descriptor']
          %s829 = smul.u32 2, %s31
          %s831 = ssub.s32 1024, 1024
          %832 = vsyncadd %s812, %s831
          %s833 = smul.addr %s829, 64
          %s834 = scalar_lea.hbm %s4, %s833
          %s836 = sshll.u32 1, 14
          %s837 = sxor.u32 4294967295, %s836
          %s840 = sshll.u32 7, 18
          %s841 = sxor.u32 4294967295, %s840
          %s842 = sand.u32 0, %s841
          %s844 = sor.u32 %s842, 0
          %s846 = sshll.u32 3, 24
          %s847 = sxor.u32 4294967295, %s846
          %s848 = sand.u32 %s844, %s847
          %s850 = sor.u32 %s848, 0
          %s851 = sshll.u32 %s815, 4
          %s852 = int_to_ptr.vmem [resolvable:$true] %s851
          %858 = sst [smem:[#allocation15]] 128
          %s859 = scalar_lea.smem [#allocation15], 1
          %860 = sst [smem:[%s859]] 256
          %s861 = scalar_lea.smem [#allocation15], 2
          %862 = sst [smem:[%s861]] 2
          %s863 = scalar_lea.smem [#allocation15], 3
          %864 = sst [smem:[%s863]] 64
          %s865 = scalar_lea.smem [#allocation15], 4
          %866 = sst [smem:[%s865]] 64
          %s867 = scalar_lea.smem [#allocation15], 5
          %868 = sst [smem:[%s867]] 4
          %870 = dma.general %s852, 1024, %s834, %s812, [#allocation14], [#allocation15], %s850, 0
        $region56: #{tpu_custom_call.1} parent=35 // pred_fallthru
          _
        // Predicated region
        $region57: #{tpu_custom_call.1} parent=35 // pred_check
          %p871 = pneg %p169
        $region58: #{tpu_custom_call.1} parent=35 // pred_check_branch
          %873 = sbr.rel (%p871) target = $region60
        $region59: #{tpu_custom_call.1} parent=35 // pred_region
          #allocation17 [shape = 'u32[6]{0}', space=smem, size = 0x18, scoped, tag = 'DMA stride descriptor']
          %s874 = smul.u32 2, %s31
          %s876 = ssub.s32 1024, 1024
          %877 = vsyncadd %s817, %s876
          %s878 = smul.addr %s874, 64
          %s879 = scalar_lea.hbm %s5, %s878
          %s881 = sshll.u32 1, 14
          %s882 = sxor.u32 4294967295, %s881
          %s885 = sshll.u32 7, 18
          %s886 = sxor.u32 4294967295, %s885
          %s887 = sand.u32 0, %s886
          %s889 = sor.u32 %s887, 0
          %s891 = sshll.u32 3, 24
          %s892 = sxor.u32 4294967295, %s891
          %s893 = sand.u32 %s889, %s892
          %s895 = sor.u32 %s893, 0
          %s896 = sshll.u32 %s820, 4
          %s897 = int_to_ptr.vmem [resolvable:$true] %s896
          %903 = sst [smem:[#allocation17]] 128
          %s904 = scalar_lea.smem [#allocation17], 1
          %905 = sst [smem:[%s904]] 256
          %s906 = scalar_lea.smem [#allocation17], 2
          %907 = sst [smem:[%s906]] 2
          %s908 = scalar_lea.smem [#allocation17], 3
          %909 = sst [smem:[%s908]] 64
          %s910 = scalar_lea.smem [#allocation17], 4
          %911 = sst [smem:[%s910]] 64
          %s912 = scalar_lea.smem [#allocation17], 5
          %913 = sst [smem:[%s912]] 4
          %915 = dma.general %s897, 1024, %s879, %s817, [#allocation16], [#allocation17], %s895, 0
        $region60: #{tpu_custom_call.1} parent=35 // pred_fallthru
          _
        // Predicated region
        $region61: #{tpu_custom_call.1} parent=35 // pred_check
          %p916 = pneg %p195
        $region62: #{tpu_custom_call.1} parent=35 // pred_check_branch
          %918 = sbr.rel (%p916) target = $region64
        $region63: #{tpu_custom_call.1} parent=35 // pred_region
          #allocation19 [shape = 'u32[6]{0}', space=smem, size = 0x18, scoped, tag = 'DMA stride descriptor']
          %s919 = smul.u32 2, %s31
          %s921 = ssub.s32 1024, 1024
          %922 = vsyncadd %s822, %s921
          %s923 = smul.addr %s919, 64
          %s924 = scalar_lea.hbm %s6, %s923
          %s926 = sshll.u32 1, 14
          %s927 = sxor.u32 4294967295, %s926
          %s930 = sshll.u32 7, 18
          %s931 = sxor.u32 4294967295, %s930
          %s932 = sand.u32 0, %s931
          %s934 = sor.u32 %s932, 0
          %s936 = sshll.u32 3, 24
          %s937 = sxor.u32 4294967295, %s936
          %s938 = sand.u32 %s934, %s937
          %s940 = sor.u32 %s938, 0
          %s941 = sshll.u32 %s825, 4
          %s942 = int_to_ptr.vmem [resolvable:$true] %s941
          %948 = sst [smem:[#allocation19]] 128
          %s949 = scalar_lea.smem [#allocation19], 1
          %950 = sst [smem:[%s949]] 256
          %s951 = scalar_lea.smem [#allocation19], 2
          %952 = sst [smem:[%s951]] 2
          %s953 = scalar_lea.smem [#allocation19], 3
          %954 = sst [smem:[%s953]] 64
          %s955 = scalar_lea.smem [#allocation19], 4
          %956 = sst [smem:[%s955]] 64
          %s957 = scalar_lea.smem [#allocation19], 5
          %958 = sst [smem:[%s957]] 4
          %960 = dma.general %s942, 1024, %s924, %s822, [#allocation18], [#allocation19], %s940, 0
        $region64: #{tpu_custom_call.1} parent=35 // pred_fallthru
          _
      $region36: #{tpu_custom_call.1} parent=5 // pred_fallthru
        _
      %p961 = scmp.le.s32.totalorder 2, %s26
      // Predicated region
      $region65: #{tpu_custom_call.1} parent=5 // pred_check
        %p962 = pneg %p961
      $region66: #{tpu_custom_call.1} parent=5 // pred_check_branch
        %964 = sbr.rel (%p962) target = $region68
      $region67: #{tpu_custom_call.1} parent=5 // pred_region
        %s965 = ssub.s32 %s26, 2
        // Predicated region
        $region69: #{tpu_custom_call.1} parent=67 // pred_check
          %p966 = pneg %p149
        $region70: #{tpu_custom_call.1} parent=67 // pred_check_branch
          %968 = sbr.rel (%p966) target = $region72
        $region71: #{tpu_custom_call.1} parent=67 // pred_region
          %s969 = sand.u32 %s134, 1
          %s970 = scalar_lea.sflag [#allocation4], %s969
          %s971 = sand.u32 %s134, 1
          %s972 = smul.addr %s971, 64
          %s973 = scalar_lea.vmem [#allocation10], %s972
          %974 = dma.done %s970, 1024
        $region72: #{tpu_custom_call.1} parent=67 // pred_fallthru
          _
        // Predicated region
        $region73: #{tpu_custom_call.1} parent=67 // pred_check
          %p975 = pneg %p175
        $region74: #{tpu_custom_call.1} parent=67 // pred_check_branch
          %977 = sbr.rel (%p975) target = $region76
        $region75: #{tpu_custom_call.1} parent=67 // pred_region
          %s978 = sand.u32 %s32, 1
          %s979 = scalar_lea.sflag [#allocation12], %s978
          %s980 = sand.u32 %s160, 1
          %s981 = smul.addr %s980, 64
          %s982 = scalar_lea.vmem [#allocation11], %s981
          %983 = dma.done %s979, 1024
        $region76: #{tpu_custom_call.1} parent=67 // pred_fallthru
          _
        // Predicated region
        $region77: #{tpu_custom_call.1} parent=67 // pred_check
          %p984 = pneg %p201
        $region78: #{tpu_custom_call.1} parent=67 // pred_check_branch
          %986 = sbr.rel (%p984) target = $region80
        $region79: #{tpu_custom_call.1} parent=67 // pred_region
          %s987 = sand.u32 %s32, 1
          %s988 = scalar_lea.sflag [#allocation12], %s987
          %s989 = sand.u32 %s186, 1
          %s990 = smul.addr %s989, 64
          %s991 = scalar_lea.vmem [#allocation13], %s990
          %992 = dma.done %s988, 1024
        $region80: #{tpu_custom_call.1} parent=67 // pred_fallthru
          _
      $region68: #{tpu_custom_call.1} parent=5 // pred_fallthru
        _
    $region6: #{tpu_custom_call.1} parent=1 // loop_footer
      %s30 = sadd.s32 1, %s26
    $region7: #{tpu_custom_call.1} parent=1 // loop_footer_branch
      %25 = sbr.rel target = $region3
    $region8: #{tpu_custom_call.1} parent=1 // loop_exit
      _
    %993 = vsyncpa [#allocation3], 1
    %s994 = scalar_lea.sflag [#allocation3], 1
    %995 = vsyncpa %s994, 1
    %996 = vsyncpa [#allocation6], 1
    %s997 = scalar_lea.sflag [#allocation6], 1
    %998 = vsyncpa %s997, 1
    %999 = vsyncpa [#allocation9], 1
    %1000 = vsyncpa [#allocation4], 1
    %s1001 = scalar_lea.sflag [#allocation4], 1
    %1002 = vsyncpa %s1001, 1
    %1003 = vsyncpa [#allocation12], 1
    %s1004 = scalar_lea.sflag [#allocation12], 1
    %1005 = vsyncpa %s1004, 1

</llo_original>
